<compile_context>
chip_gen: v5e
topology: v5e:2x2
jax: 0.10.0
libtpu: 0.0.40
codegen_flags: <defaults>
</compile_context>

<pallas_src>
import math

import jax
import jax.numpy as jnp
from jax.experimental import pallas as pl
from jax.experimental.pallas import tpu as pltpu


def _normalize_kernel(x_ref, mu_ref, inv_sigma_ref, o_ref):
    # x_ref:         (TM, TD) tile of X
    # mu_ref:        (1, TD)  f32 broadcast row
    # inv_sigma_ref: (1, TD)  f32 broadcast row (reciprocal of clamped std)
    # o_ref:         (TM, TD) output tile (input dtype)
    x = x_ref[...].astype(jnp.float32)
    o_ref[...] = ((x - mu_ref[...]) * inv_sigma_ref[...]).astype(o_ref.dtype)


def _device_tuning():
    """(target_tile_bytes, vmem_limit_bytes) per TPU generation."""
    kind = ""
    try:
        kind = jax.devices()[0].device_kind.lower()
    except Exception:  # pragma: no cover - be robust if device query fails
        pass
    if "v7" in kind:
        return 7 << 20, 48 * 1024 * 1024   # ~7 MiB tiles, 48 MiB of 64 MiB VMEM
    if "v6" in kind:
        return 4 << 20, 32 * 1024 * 1024   # ~4 MiB tiles hit the v6e roofline plateau
    return 2 << 20, 32 * 1024 * 1024       # v5e / unknown: 2 MiB is already <8% overhead


def _choose_tiles(n_rows, d, itemsize, target_tile_bytes, vmem_limit_bytes):
    """Pick (tm, td). td = d (contiguous slabs) unless d is genuinely huge."""
    td = d
    # Double-buffered footprint of X tile + out tile at the minimum tm=8.
    min_footprint = 4 * 8 * d * itemsize
    if min_footprint > vmem_limit_bytes // 2 and d % 128 == 0:
        cand = (d // 128) * 128
        while cand >= 128:
            if d % cand == 0 and 4 * 8 * cand * itemsize <= vmem_limit_bytes // 2:
                td = cand
                break
            cand -= 128

    # Row tile: ~target_tile_bytes per X tile, rounded to a multiple of 8.
    tm = max(8, (target_tile_bytes // max(td * itemsize, 1)) // 8 * 8)
    n_pad8 = ((n_rows + 7) // 8) * 8
    tm = min(tm, n_pad8)
    # Keep at least 2 row blocks when there is enough work: v7x has 2 TCs and a
    # (1, 1) grid would leave one idle (no-op on single-core v5e/v6e).
    if n_rows >= 16:
        half = max(8, ((n_rows + 1) // 2) // 8 * 8)
        tm = min(tm, half)
    return max(8, tm), td


def normalized_representation(x, mu, sigma, *, tol=1e-5):
    """(x - mu) / clamp(sigma, tol), mu/sigma broadcast over rows. x: [N, D]."""
    N, D = x.shape
    dtype = x.dtype
    itemsize = jnp.dtype(dtype).itemsize

    # Parameter prep (matches torch.clamp(std, tol) in __init__; reciprocal is
    # hoisted so the hot loop is subtract + multiply). Kept in f32.
    mu_f32 = mu.astype(jnp.float32)
    inv_sigma_f32 = 1.0 / jnp.maximum(sigma.astype(jnp.float32), tol)

    # Fold rows into the lane dim when D is not lane-aligned so output stores
    # are full-width unmasked vst instead of masked partial stores.
    fold = 1
    if D % 128 != 0:
        k = 128 // math.gcd(D, 128)
        if N % k == 0:
            fold = k
    n_rows, d_eff = N // fold, D * fold

    x2 = x.reshape(n_rows, d_eff)
    mu2 = jnp.tile(mu_f32, fold).reshape(1, d_eff)
    inv2 = jnp.tile(inv_sigma_f32, fold).reshape(1, d_eff)

    target_tile_bytes, vmem_limit_bytes = _device_tuning()
    tm, td = _choose_tiles(n_rows, d_eff, itemsize, target_tile_bytes, vmem_limit_bytes)

    # Feature axis outermost so the (1, td) mu / inv_sigma rows stay resident
    # across the inner row loop; rows use pl.cdiv (no padding, ragged last block).
    grid = (d_eff // td, pl.cdiv(n_rows, tm))

    out = pl.pallas_call(
        _normalize_kernel,
        out_shape=jax.ShapeDtypeStruct((n_rows, d_eff), dtype),
        grid_spec=pltpu.PrefetchScalarGridSpec(
            num_scalar_prefetch=0,
            grid=grid,
            in_specs=[
                pl.BlockSpec((tm, td), lambda j, i: (i, j)),   # X tile
                pl.BlockSpec((1, td), lambda j, i: (0, j)),    # mu row (f32)
                pl.BlockSpec((1, td), lambda j, i: (0, j)),    # 1/sigma row (f32)
            ],
            out_specs=pl.BlockSpec((tm, td), lambda j, i: (i, j)),
        ),
        compiler_params=pltpu.CompilerParams(
            dimension_semantics=("parallel", "parallel"),
            vmem_limit_bytes=vmem_limit_bytes,
        ),
    )(x2, mu2, inv2)

    return out.reshape(N, D)


if __name__ == "__main__":
    key = jax.random.PRNGKey(0)
    k_x1, k_x2, k_x3, k_mu, k_sigma = jax.random.split(key, 5)

    def check(N, D, kx):
        x = jax.random.normal(kx, (N, D), dtype=jnp.float32)
        # Deterministic synthetic "dataset metadata" stats (no checkpoint load).
        mu = jax.random.normal(k_mu, (D,), dtype=jnp.float32) * 0.5
        sigma = jnp.abs(jax.random.normal(k_sigma, (D,), dtype=jnp.float32)) + 0.1
        sigma = sigma.at[: min(4, D)].set(1e-8)  # exercise the clamp(tol) path

        out = jax.block_until_ready(normalized_representation(x, mu, sigma, tol=1e-5))

        ref = (x - mu[None, :]) / jnp.maximum(sigma, 1e-5)[None, :]
        assert out.shape == (N, D) and out.dtype == x.dtype
        # x*(1/s) vs x/s differs by ~1 ulp relative -> slightly relaxed tolerance.
        assert jnp.allclose(out, ref, rtol=1e-5, atol=1e-5)

    check(16, 128, k_x1)   # lane-aligned, 2 row blocks (v7x megacore path)
    check(23, 128, k_x2)   # ragged trailing row block, no pad/slice passes
    check(16, 32, k_x3)    # D < 128 -> rows folded into the lane dim (k=4)

    print("KERNEL_OK")
</pallas_src>

<mosaic_0001>
module attributes {stable_mosaic.version = 11 : i64} {
  func.func @_normalize_kernel(%arg0: i32, %arg1: i32, %arg2: memref<8x128xf32, #tpu.memory_space<vmem>>, %arg3: memref<1x128xf32, #tpu.memory_space<vmem>>, %arg4: memref<1x128xf32, #tpu.memory_space<vmem>>, %arg5: memref<8x128xf32, #tpu.memory_space<vmem>>) attributes {dimension_semantics = [#tpu.dimension_semantics<parallel>, #tpu.dimension_semantics<parallel>], iteration_bounds = array<i64: 1, 2>, scalar_prefetch = 0 : i64, scratch_operands = 0 : i64, tpu.core_type = #tpu.core_type<tc>, window_params = [{transform_indices = @transform_0, window_bounds = array<i64: 8, 128>}, {transform_indices = @transform_1, window_bounds = array<i64: 1, 128>}, {transform_indices = @transform_2, window_bounds = array<i64: 1, 128>}, {transform_indices = @transform_3, window_bounds = array<i64: 8, 128>}]} {
    %c0 = arith.constant 0 : index
    %c0_0 = arith.constant 0 : index
    %0 = vector.load %arg2[%c0, %c0_0] : memref<8x128xf32, #tpu.memory_space<vmem>>, vector<8x128xf32>
    %c0_1 = arith.constant 0 : index
    %c0_2 = arith.constant 0 : index
    %1 = vector.load %arg3[%c0_1, %c0_2] : memref<1x128xf32, #tpu.memory_space<vmem>>, vector<1x128xf32>
    %2 = vector.broadcast %1 : vector<1x128xf32> to vector<8x128xf32>
    %3 = arith.subf %0, %2 : vector<8x128xf32>
    %c0_3 = arith.constant 0 : index
    %c0_4 = arith.constant 0 : index
    %4 = vector.load %arg4[%c0_3, %c0_4] : memref<1x128xf32, #tpu.memory_space<vmem>>, vector<1x128xf32>
    %5 = vector.broadcast %4 : vector<1x128xf32> to vector<8x128xf32>
    %6 = arith.mulf %3, %5 : vector<8x128xf32>
    %c0_5 = arith.constant 0 : index
    %c0_6 = arith.constant 0 : index
    %7 = vector.load %arg5[%c0_5, %c0_6] : memref<8x128xf32, #tpu.memory_space<vmem>>, vector<8x128xf32>
    tpu.vector_store %arg5[%c0_5, %c0_6], %6 {strides = array<i32>} : memref<8x128xf32, #tpu.memory_space<vmem>>, vector<8x128xf32>,
    return
  }
  func.func @transform_0(%arg0: i32, %arg1: i32) -> (i32, i32) {
    %c0_i32 = arith.constant 0 : i32
    return %arg1, %arg0 : i32, i32
  }
  func.func @transform_1(%arg0: i32, %arg1: i32) -> (i32, i32) {
    %c0_i32 = arith.constant 0 : i32
    %c0_i32_0 = arith.constant 0 : i32
    return %c0_i32, %arg0 : i32, i32
  }
  func.func @transform_2(%arg0: i32, %arg1: i32) -> (i32, i32) {
    %c0_i32 = arith.constant 0 : i32
    %c0_i32_0 = arith.constant 0 : i32
    return %c0_i32, %arg0 : i32, i32
  }
  func.func @transform_3(%arg0: i32, %arg1: i32) -> (i32, i32) {
    %c0_i32 = arith.constant 0 : i32
    return %arg1, %arg0 : i32, i32
  }
}

</mosaic_0001>

<llo_original>
// kernel: tpu_custom_call.1
$region0: #{tpu_custom_call.1}
  #allocation0 [shape = 'u32[]', space=smem, size = 0x4, offset = 0x4, fixed_abs, tag = 'smem constant byte address 0x4 - core index']
  #allocation1 [shape = 'u32[72,128]{1,0:T(1,128)}', space=vmem, size = 0x9000, scoped, tag = 'internal scratch']
  %s0 = inlined_call_operand.hbm [shape: f32[16,128], index: 0, kind: input, shape index: {}]
  %s1 = inlined_call_operand.hbm [shape: f32[1,128], index: 1, kind: input, shape index: {}]
  %s2 = inlined_call_operand.vmem [shape: f32[1,128], index: 2, kind: input, shape index: {}]
  %s3 = inlined_call_operand.hbm [shape: f32[16,128], index: 3, kind: output, shape index: {}]
  %s4 = sld [smem:[#allocation0]]
  $region53: #{tpu_custom_call.1} parent=0
    _
  %s6 = ssub.s32 1, %s4
  %s7 = scalar_select 0, %s6, %s4
  $region1: #{tpu_custom_call.1} parent=0
    #allocation2 [shape = 'u8[8192]{0}', space=vmem, size = 0x2000, scoped, tag = 'input window, operand 0']
    #allocation3 [shape = 's32[2]{0}', space=sflag, size = 0x8, scoped, tag = 'scoped memory for tpu_custom_call.1']
    #allocation4 [shape = 's32[2]{0}', space=sflag, size = 0x8, scoped, tag = 'scoped memory for tpu_custom_call.1']
    #allocation5 [shape = 'u8[512]{0}', space=vmem, size = 0x400, scoped, tag = 'input window, operand 1, single buffered']
    #allocation6 [shape = 's32[1]{0}', space=sflag, size = 0x4, scoped, tag = 'scoped memory for tpu_custom_call.1']
    #allocation7 [shape = 'u8[8192]{0}', space=vmem, size = 0x2000, scoped, tag = 'output window, operand 0']
    %8 = vsyncpa [#allocation3], 0
    %s9 = scalar_lea.sflag [#allocation3], 1
    %10 = vsyncpa %s9, 0
    %11 = vsyncpa [#allocation6], 0
    %12 = vsyncpa [#allocation4], 0
    %s13 = scalar_lea.sflag [#allocation4], 1
    %14 = vsyncpa %s13, 0
    loop: start=0, step=1, limit=4
    $region2: #{tpu_custom_call.1} parent=1 // loop_pre_header
      _
    $region3: #{tpu_custom_call.1} parent=1 // loop_header
      %s16 = sphi 0, %s20
      %p17 = scmp.ge.s32.totalorder %s16, 4
      %s23 = sphi 0, %s35
      %s24 = sphi 0, %s31
      %s25 = sphi 0, %s23
      %s26 = sphi 0, %s24
      %s27 = sphi 0, %s25
      %s28 = sphi 0, %s26
      %s40 = sphi 0, %s42
      %s43 = sphi 0, %s40
      %s44 = sphi 0, %s43
      %s60 = sphi 0, %s44
      %s66 = sphi 0, %s68
      %s69 = sphi 0, %s66
      %s70 = sphi 0, %s69
      %s86 = sphi 0, %s70
      %s92 = sphi 0, %s94
      %s95 = sphi 0, %s92
      %s96 = sphi 0, %s95
      %s112 = sphi 0, %s96
      %s120 = sphi 0, %s122
      %s123 = sphi 0, %s120
      %s124 = sphi 0, %s123
      %s140 = sphi 0, %s124
    $region4: #{tpu_custom_call.1} parent=1 // loop_header_branch
      %19 = sbr.rel (%p17) target = $region8
    $region5: #{tpu_custom_call.1} parent=1 // loop_body
      %s21 = ssub.s32 %s16, 1
      %s22 = ssub.s32 %s16, 2
      %s29 = sadd.s32 1, %s24
      %p30 = scmp.ge.s32.totalorder %s29, 2
      %s31 = scalar_select %p30, 0, %s29
      %s32 = sadd.s32 1, %s23
      %s33 = scalar_select %p30, %s32, %s23
      %p34 = scmp.ge.s32.totalorder %s33, 1
      %s35 = scalar_select %p34, 0, %s33
      %s36 = ssub.s32 %s24, %s31
      %s37 = ssub.s32 %s23, %s35
      %s38 = sor.u32 %s36, %s37
      %p39 = scmp.eq.s32.totalorder %s38, 0
      %s41 = sadd.s32 %s40, 1
      %s42 = scalar_select %p39, %s40, %s41
      %p45 = pneg %p39
      %p46 = scmp.eq.s32.totalorder %s16, 1
      %p47 = por %p45, %p46
      %p48 = scmp.ne.s32.totalorder %s40, %s43
      %p49 = scmp.eq.s32.totalorder %s16, 0
      %p50 = por %p48, %p49
      %p51 = scmp.ne.s32.totalorder %s40, %s43
      %p52 = scmp.eq.s32.totalorder %s21, 1
      %p53 = por %p51, %p52
      %p54 = scmp.ne.s32.totalorder %s43, %s44
      %p55 = scmp.eq.s32.totalorder %s21, 0
      %p56 = por %p54, %p55
      %p57 = scmp.ne.s32.totalorder %s43, %s44
      %p58 = scmp.eq.s32.totalorder %s22, 1
      %p59 = por %p57, %p58
      %p61 = scmp.ne.s32.totalorder %s44, %s60
      %p62 = scmp.eq.s32.totalorder %s22, 0
      %p63 = por %p61, %p62
      %s64 = ssub.s32 %s23, %s35
      %p65 = scmp.eq.s32.totalorder %s64, 0
      %s67 = sadd.s32 %s66, 1
      %s68 = scalar_select %p65, %s66, %s67
      %p71 = pneg %p65
      %p72 = scmp.eq.s32.totalorder %s16, 1
      %p73 = por %p71, %p72
      %p74 = scmp.ne.s32.totalorder %s66, %s69
      %p75 = scmp.eq.s32.totalorder %s16, 0
      %p76 = por %p74, %p75
      %p77 = scmp.ne.s32.totalorder %s66, %s69
      %p78 = scmp.eq.s32.totalorder %s21, 1
      %p79 = por %p77, %p78
      %p80 = scmp.ne.s32.totalorder %s69, %s70
      %p81 = scmp.eq.s32.totalorder %s21, 0
      %p82 = por %p80, %p81
      %p83 = scmp.ne.s32.totalorder %s69, %s70
      %p84 = scmp.eq.s32.totalorder %s22, 1
      %p85 = por %p83, %p84
      %p87 = scmp.ne.s32.totalorder %s70, %s86
      %p88 = scmp.eq.s32.totalorder %s22, 0
      %p89 = por %p87, %p88
      %s90 = ssub.s32 %s23, %s35
      %p91 = scmp.eq.s32.totalorder %s90, 0
      %s93 = sadd.s32 %s92, 1
      %s94 = scalar_select %p91, %s92, %s93
      %p97 = pneg %p91
      %p98 = scmp.eq.s32.totalorder %s16, 1
      %p99 = por %p97, %p98
      %p100 = scmp.ne.s32.totalorder %s92, %s95
      %p101 = scmp.eq.s32.totalorder %s16, 0
      %p102 = por %p100, %p101
      %p103 = scmp.ne.s32.totalorder %s92, %s95
      %p104 = scmp.eq.s32.totalorder %s21, 1
      %p105 = por %p103, %p104
      %p106 = scmp.ne.s32.totalorder %s95, %s96
      %p107 = scmp.eq.s32.totalorder %s21, 0
      %p108 = por %p106, %p107
      %p109 = scmp.ne.s32.totalorder %s95, %s96
      %p110 = scmp.eq.s32.totalorder %s22, 1
      %p111 = por %p109, %p110
      %p113 = scmp.ne.s32.totalorder %s96, %s112
      %p114 = scmp.eq.s32.totalorder %s22, 0
      %p115 = por %p113, %p114
      %s116 = ssub.s32 %s24, %s31
      %s117 = ssub.s32 %s23, %s35
      %s118 = sor.u32 %s116, %s117
      %p119 = scmp.eq.s32.totalorder %s118, 0
      %s121 = sadd.s32 %s120, 1
      %s122 = scalar_select %p119, %s120, %s121
      %p125 = pneg %p119
      %p126 = scmp.eq.s32.totalorder %s16, 1
      %p127 = por %p125, %p126
      %p128 = scmp.ne.s32.totalorder %s120, %s123
      %p129 = scmp.eq.s32.totalorder %s16, 0
      %p130 = por %p128, %p129
      %p131 = scmp.ne.s32.totalorder %s120, %s123
      %p132 = scmp.eq.s32.totalorder %s21, 1
      %p133 = por %p131, %p132
      %p134 = scmp.ne.s32.totalorder %s123, %s124
      %p135 = scmp.eq.s32.totalorder %s21, 0
      %p136 = por %p134, %p135
      %p137 = scmp.ne.s32.totalorder %s123, %s124
      %p138 = scmp.eq.s32.totalorder %s22, 1
      %p139 = por %p137, %p138
      %p141 = scmp.ne.s32.totalorder %s124, %s140
      %p142 = scmp.eq.s32.totalorder %s22, 0
      %p143 = por %p141, %p142
      %p144 = scmp.le.s32.totalorder 1, %s16
      %p145 = scmp.lt.s32.totalorder %s16, 3
      %p146 = pnand %p144, %p145
      %p147 = pneg %p146
      // Predicated region
      $region9: #{tpu_custom_call.1} parent=5 // pred_check
        _
      $region10: #{tpu_custom_call.1} parent=5 // pred_check_branch
        %149 = sbr.rel (%p146) target = $region12
      $region11: #{tpu_custom_call.1} parent=5 // pred_region
        %s150 = ssub.s32 %s16, 1
        // Predicated region
        $region13: #{tpu_custom_call.1} parent=11 // pred_check
          %p151 = pneg %p82
        $region14: #{tpu_custom_call.1} parent=11 // pred_check_branch
          %153 = sbr.rel (%p151) target = $region16
        $region15: #{tpu_custom_call.1} parent=11 // pred_region
          %155 = vsyncadd [#allocation6], 0
          %s156 = scalar_lea.hbm %s1, %s25
          %s158 = sshll.u32 %s156, 4
          %s159 = int_to_ptr.hbm [resolvable:$true] %s158
          %s160 = sshll.u32 [#allocation5], 4
          %s161 = int_to_ptr.vmem [resolvable:$true] %s160
          %163 = dma.hbm_to_vmem [thread:$0]  %s159, 16, %s161, [#allocation6]
        $region16: #{tpu_custom_call.1} parent=11 // pred_fallthru
          _
        // Predicated region
        $region17: #{tpu_custom_call.1} parent=11 // pred_check
          %p164 = pneg %p108
        $region18: #{tpu_custom_call.1} parent=11 // pred_check_branch
          %166 = sbr.rel (%p164) target = $region20
        $region19: #{tpu_custom_call.1} parent=11 // pred_region
          %p167 = scmp.lt.s32.totalorder %s25, 0
          %s168 = scalar_select %p167, %s25, 0
          %s169 = scalar_lea.vmem %s2, %s168
        $region20: #{tpu_custom_call.1} parent=11 // pred_fallthru
          _
      $region12: #{tpu_custom_call.1} parent=5 // pred_fallthru
        _
      %p170 = scmp.lt.s32.totalorder %s16, 2
      // Predicated region
      $region21: #{tpu_custom_call.1} parent=5 // pred_check
        %p171 = pneg %p170
      $region22: #{tpu_custom_call.1} parent=5 // pred_check_branch
        %173 = sbr.rel (%p171) target = $region24
      $region23: #{tpu_custom_call.1} parent=5 // pred_region
        // Predicated region
        $region25: #{tpu_custom_call.1} parent=23 // pred_check
          %p174 = pneg %p50
        $region26: #{tpu_custom_call.1} parent=23 // pred_check_branch
          %176 = sbr.rel (%p174) target = $region28
        $region27: #{tpu_custom_call.1} parent=23 // pred_region
          %s177 = sand.u32 %s40, 1
          %s178 = scalar_lea.sflag [#allocation3], %s177
          %s179 = sand.u32 %s40, 1
          %s180 = smul.addr %s179, 8
          %s181 = scalar_lea.vmem [#allocation2], %s180
          %183 = vsyncadd %s178, 0
          %s184 = sadd.s32 %s23, %s24
          %s185 = smul.addr %s184, 8
          %s186 = scalar_lea.hbm %s0, %s185
          %s188 = sshll.u32 %s186, 4
          %s189 = int_to_ptr.hbm [resolvable:$true] %s188
          %s190 = sshll.u32 %s181, 4
          %s191 = int_to_ptr.vmem [resolvable:$true] %s190
          %193 = dma.hbm_to_vmem [thread:$0]  %s189, 128, %s191, %s178
        $region28: #{tpu_custom_call.1} parent=23 // pred_fallthru
          _
      $region24: #{tpu_custom_call.1} parent=5 // pred_fallthru
        _
      %p194 = scmp.le.s32.totalorder 1, %s16
      %p195 = scmp.lt.s32.totalorder %s16, 3
      %p196 = pnand %p194, %p195
      %p197 = pneg %p196
      // Predicated region
      $region29: #{tpu_custom_call.1} parent=5 // pred_check
        _
      $region30: #{tpu_custom_call.1} parent=5 // pred_check_branch
        %199 = sbr.rel (%p196) target = $region32
      $region31: #{tpu_custom_call.1} parent=5 // pred_region
        %s200 = ssub.s32 %s16, 1
        %s201 = sand.u32 %s43, 1
        %s202 = scalar_lea.sflag [#allocation3], %s201
        %s203 = sand.u32 %s43, 1
        %s204 = smul.addr %s203, 8
        %s205 = scalar_lea.vmem [#allocation2], %s204
        // Predicated region
        $region33: #{tpu_custom_call.1} parent=31 // pred_check
          %p206 = pneg %p56
        $region34: #{tpu_custom_call.1} parent=31 // pred_check_branch
          %208 = sbr.rel (%p206) target = $region36
        $region35: #{tpu_custom_call.1} parent=31 // pred_region
          %210 = dma.done %s202, 128
        $region36: #{tpu_custom_call.1} parent=31 // pred_fallthru
          _
        // Predicated region
        $region37: #{tpu_custom_call.1} parent=31 // pred_check
          %p211 = pneg %p82
        $region38: #{tpu_custom_call.1} parent=31 // pred_check_branch
          %213 = sbr.rel (%p211) target = $region40
        $region39: #{tpu_custom_call.1} parent=31 // pred_region
          %215 = dma.done [#allocation6], 16
        $region40: #{tpu_custom_call.1} parent=31 // pred_fallthru
          _
        %s216 = sand.u32 %s43, 1
        %s217 = scalar_lea.sflag [#allocation3], %s216
        %s218 = sand.u32 %s43, 1
        %s219 = smul.addr %s218, 8
        %s220 = scalar_lea.vmem [#allocation2], %s219
        %p221 = pneg %p56
        %p222 = pneg %p53
        %p223 = pneg %p82
        %p224 = pneg %p79
        %p225 = scmp.lt.s32.totalorder %s25, 0
        %s226 = scalar_select %p225, %s25, 0
        %s227 = scalar_lea.vmem %s2, %s226
        %p228 = pneg %p108
        %p229 = pneg %p105
        %p230 = pneg %p136
        %p231 = pneg %p133
        %s232 = sand.u32 %s123, 1
        %s233 = scalar_lea.sflag [#allocation4], %s232
        %s234 = sand.u32 %s123, 1
        %s235 = smul.addr %s234, 8
        %s236 = scalar_lea.vmem [#allocation7], %s235
        %p237 = scmp.lt.s32.totalorder %s25, 0
        %s238 = scalar_select %p237, %s25, 0
        %s239 = scalar_lea.vmem %s2, %s238
        %v240 = vld [vmem:[%s205] sm:$0xff]
        %v241 = vld [vmem:[#allocation5] sm:$0x1]
        %v243 = vperm.slane %v241, 0
        %v245 = vsub.f32 %v240, %v243
        %v246 = vld [vmem:[%s239] sm:$0x1]
        %v248 = vperm.slane %v246, 0
        %v250 = vmul.f32 %v245, %v248
        %251 = vst [vmem:[%s236] sm:$0xff] %v250
        %s252 = sand.u32 %s123, 1
        %s253 = scalar_lea.sflag [#allocation4], %s252
        %s254 = sand.u32 %s123, 1
        %s255 = smul.addr %s254, 8
        %s256 = scalar_lea.vmem [#allocation7], %s255
        // Predicated region
        $region41: #{tpu_custom_call.1} parent=31 // pred_check
          %p257 = pneg %p133
        $region42: #{tpu_custom_call.1} parent=31 // pred_check_branch
          %259 = sbr.rel (%p257) target = $region44
        $region43: #{tpu_custom_call.1} parent=31 // pred_region
          %261 = vsyncadd %s253, 0
          %s262 = sadd.s32 %s25, %s26
          %s263 = smul.addr %s262, 8
          %s264 = scalar_lea.hbm %s3, %s263
          %s266 = sshll.u32 %s256, 4
          %s267 = int_to_ptr.vmem [resolvable:$true] %s266
          %s268 = sshll.u32 %s264, 4
          %s269 = int_to_ptr.hbm [resolvable:$true] %s268
          %271 = dma.vmem_to_hbm [thread:$0]  %s267, 128, %s269, %s253
        $region44: #{tpu_custom_call.1} parent=31 // pred_fallthru
          _
      $region32: #{tpu_custom_call.1} parent=5 // pred_fallthru
        _
      %p272 = scmp.le.s32.totalorder 2, %s16
      // Predicated region
      $region45: #{tpu_custom_call.1} parent=5 // pred_check
        %p273 = pneg %p272
      $region46: #{tpu_custom_call.1} parent=5 // pred_check_branch
        %275 = sbr.rel (%p273) target = $region48
      $region47: #{tpu_custom_call.1} parent=5 // pred_region
        %s276 = ssub.s32 %s16, 2
        // Predicated region
        $region49: #{tpu_custom_call.1} parent=47 // pred_check
          %p277 = pneg %p139
        $region50: #{tpu_custom_call.1} parent=47 // pred_check_branch
          %279 = sbr.rel (%p277) target = $region52
        $region51: #{tpu_custom_call.1} parent=47 // pred_region
          %s280 = sand.u32 %s124, 1
          %s281 = scalar_lea.sflag [#allocation4], %s280
          %s282 = sand.u32 %s124, 1
          %s283 = smul.addr %s282, 8
          %s284 = scalar_lea.vmem [#allocation7], %s283
          %286 = dma.done %s281, 128
        $region52: #{tpu_custom_call.1} parent=47 // pred_fallthru
          _
      $region48: #{tpu_custom_call.1} parent=5 // pred_fallthru
        _
    $region6: #{tpu_custom_call.1} parent=1 // loop_footer
      %s20 = sadd.s32 1, %s16
    $region7: #{tpu_custom_call.1} parent=1 // loop_footer_branch
      %15 = sbr.rel target = $region3
    $region8: #{tpu_custom_call.1} parent=1 // loop_exit
      _
    %287 = vsyncpa [#allocation3], 1
    %s288 = scalar_lea.sflag [#allocation3], 1
    %289 = vsyncpa %s288, 1
    %290 = vsyncpa [#allocation6], 1
    %291 = vsyncpa [#allocation4], 1
    %s292 = scalar_lea.sflag [#allocation4], 1
    %293 = vsyncpa %s292, 1

</llo_original>
